<compile_context>
chip_gen: v7x
topology: tpu7x:2x2x1
jax: 0.10.0
libtpu: 0.0.40
codegen_flags: <defaults>
</compile_context>

<pallas_src>
import jax
import jax.numpy as jnp
from jax.experimental import pallas as pl
from jax.experimental.pallas import tpu as pltpu

EPS = 1e-5      # PyTorch BatchNorm1d default eps
LANE = 128
SUBLANE = 8


def _round_up(v, m):
    return (v + m - 1) // m * m


def _make_kernel(n_true):
    """Build the two-phase MLP kernel; n_true = number of real (unpadded) rows."""

    def kernel(x_ref, w1t_ref, gamma_ref, beta_ref, w2t_ref, o_ref,
               sum_ref, sumsq_ref):
        phase = pl.program_id(0)   # 0: accumulate BN stats, 1: normalize + fc2
        tile = pl.program_id(1)    # N-tile index

        @pl.when(jnp.logical_and(phase == 0, tile == 0))
        def _():
            sum_ref[...] = jnp.zeros_like(sum_ref)
            sumsq_ref[...] = jnp.zeros_like(sumsq_ref)

        # fc1 for this N-tile: [bn, C_in] @ [C_in, C_hid] -> f32 [bn, C_hid].
        # Recomputed in phase 1 instead of materializing the full activation.
        y1 = jnp.dot(x_ref[...], w1t_ref[...], preferred_element_type=jnp.float32)

        @pl.when(phase == 0)
        def _():
            # Fused single pass: sum and sum-of-squares together (one traversal
            # of y1, var derived later as E[x^2] - mean^2).  Zero-padded rows
            # contribute 0 to both, so padding N is statistics-neutral.
            sum_ref[...] += jnp.sum(y1, axis=0, keepdims=True)
            sumsq_ref[...] += jnp.sum(y1 * y1, axis=0, keepdims=True)

        @pl.when(phase == 1)
        def _():
            inv_n = jnp.float32(1.0 / n_true)
            mean = sum_ref[...] * inv_n
            var = sumsq_ref[...] * inv_n - mean * mean      # biased batch var
            scale = gamma_ref[...] * jax.lax.rsqrt(var + EPS)   # [1, C_hid]
            shift = beta_ref[...] - mean * scale                # [1, C_hid]
            h = jnp.maximum(y1 * scale + shift, 0.0)            # BN + ReLU (f32)
            # fc2: [bn, C_hid] @ [C_hid, C_out_pad] -> lane-dense store.
            o_ref[...] = jnp.dot(
                h.astype(w2t_ref.dtype), w2t_ref[...],
                preferred_element_type=jnp.float32,
            ).astype(o_ref.dtype)

    return kernel


def prepare_mlp_params(w1, gamma, beta, w2, compute_dtype=jnp.float32):
    """One-time weight prep (hoisted out of the per-forward path):
    pre-transpose, lane-pad the output dim to a multiple of 128, cast MXU
    operands to compute_dtype.  BN affine params stay f32."""
    c_hid, c_in = w1.shape
    c_out = w2.shape[0]
    c_out_pad = _round_up(c_out, LANE)

    w1t = jnp.transpose(w1).astype(compute_dtype)            # [C_in, C_hid]
    w2t = jnp.transpose(w2)                                   # [C_hid, C_out]
    if c_out_pad != c_out:
        w2t = jnp.pad(w2t, ((0, 0), (0, c_out_pad - c_out)))  # zero lanes
    w2t = w2t.astype(compute_dtype)

    return dict(
        w1t=w1t,
        w2t=w2t,
        gamma=gamma.reshape(1, c_hid).astype(jnp.float32),
        beta=beta.reshape(1, c_hid).astype(jnp.float32),
        c_out=c_out,
    )


def mlp_forward(x, params, *, block_n=128):
    """x: [N, C_in] (e.g. both BYOL views concatenated along N)."""
    n, c_in = x.shape
    w1t, w2t = params["w1t"], params["w2t"]
    gamma, beta = params["gamma"], params["beta"]
    c_hid = w1t.shape[1]
    c_out_pad = w2t.shape[1]
    c_out = params["c_out"]

    # N tiling: block must be a sublane multiple; pad N with zero rows
    # (zero rows contribute nothing to the BN sums; padded outputs sliced off).
    block_n = min(block_n, _round_up(n, SUBLANE))
    n_pad = _round_up(n, block_n)
    n_tiles = n_pad // block_n

    xin = x.astype(w1t.dtype)
    if n_pad != n:
        xin = jnp.pad(xin, ((0, n_pad - n), (0, 0)))

    out = pl.pallas_call(
        _make_kernel(n),
        out_shape=jax.ShapeDtypeStruct((n_pad, c_out_pad), jnp.float32),
        grid=(2, n_tiles),  # (phase, N-tile); last axis is innermost
        in_specs=[
            pl.BlockSpec((block_n, c_in), lambda p, t: (t, 0)),   # x tile
            pl.BlockSpec((c_in, c_hid), lambda p, t: (0, 0)),     # W1^T (resident)
            pl.BlockSpec((1, c_hid), lambda p, t: (0, 0)),        # gamma
            pl.BlockSpec((1, c_hid), lambda p, t: (0, 0)),        # beta
            pl.BlockSpec((c_hid, c_out_pad), lambda p, t: (0, 0)),# W2^T (resident)
        ],
        out_specs=pl.BlockSpec((block_n, c_out_pad), lambda p, t: (t, 0)),
        scratch_shapes=[
            pltpu.VMEM((1, c_hid), jnp.float32),   # per-channel sum
            pltpu.VMEM((1, c_hid), jnp.float32),   # per-channel sum of squares
        ],
        compiler_params=pltpu.CompilerParams(
            # Both axes are reductions/ordered (shared BN stats scratch).
            dimension_semantics=("arbitrary", "arbitrary"),
        ),
    )(xin, w1t, gamma, beta, w2t)

    return out[:n, :c_out]


def reference_forward(x, w1, gamma, beta, w2):
    """Pure-JAX reference matching PyTorch train-mode fc-bn-relu-fc."""
    y1 = x @ w1.T
    mean = jnp.mean(y1, axis=0, keepdims=True)
    var = jnp.mean((y1 - mean) ** 2, axis=0, keepdims=True)
    h = (y1 - mean) / jnp.sqrt(var + EPS) * gamma + beta
    h = jnp.maximum(h, 0.0)
    return h @ w2.T


if __name__ == "__main__":
    # BYOL neck at small shapes; the two augmented views are fused along N
    # (bigger MXU M dim, one pallas_call instead of two).
    N_PER_VIEW, C_IN, C_HID, C_OUT = 48, 64, 128, 32
    N = 2 * N_PER_VIEW  # 96 -> padded to 128 rows (2 tiles of 64) inside the wrapper

    key = jax.random.PRNGKey(0)
    kx1, kx2, kw1, kw2 = jax.random.split(key, 4)

    x_v1 = jax.random.normal(kx1, (N_PER_VIEW, C_IN), dtype=jnp.float32)
    x_v2 = jax.random.normal(kx2, (N_PER_VIEW, C_IN), dtype=jnp.float32)
    x = jnp.concatenate([x_v1, x_v2], axis=0)   # fused views: [96, 64]

    # Linear weights (bias=False per module config), BatchNorm1d defaults.
    w1 = jax.random.normal(kw1, (C_HID, C_IN), dtype=jnp.float32) / jnp.sqrt(C_IN)
    w2 = jax.random.normal(kw2, (C_OUT, C_HID), dtype=jnp.float32) / jnp.sqrt(C_HID)
    gamma = jnp.ones((C_HID,), dtype=jnp.float32)
    beta = jnp.zeros((C_HID,), dtype=jnp.float32)

    ref = reference_forward(x, w1, gamma, beta, w2)

    # ---- f32 MXU-operand path (v5e-friendly) ----
    params_f32 = prepare_mlp_params(w1, gamma, beta, w2, compute_dtype=jnp.float32)
    out_f32 = mlp_forward(x, params_f32, block_n=64)
    jax.block_until_ready(out_f32)
    assert out_f32.shape == (N, C_OUT)
    # Tolerance allows for MXU f32 precision-mode / reduction-order differences
    # vs. the XLA reference while still catching real BN/matmul bugs.
    assert jnp.allclose(out_f32, ref, atol=2e-3, rtol=2e-3)

    # ---- bf16 MXU-operand path (v6e/v7x): BN math stays f32 in-kernel ----
    params_bf16 = prepare_mlp_params(w1, gamma, beta, w2, compute_dtype=jnp.bfloat16)
    out_bf16 = mlp_forward(x, params_bf16, block_n=64)
    jax.block_until_ready(out_bf16)
    assert out_bf16.shape == (N, C_OUT)
    assert float(jnp.max(jnp.abs(out_bf16 - ref))) < 0.1

    print("KERNEL_OK")
</pallas_src>

<mosaic_0001>
module attributes {stable_mosaic.version = 11 : i64} {
  func.func @kernel(%arg0: i32, %arg1: i32, %arg2: memref<64x64xf32, #tpu.memory_space<vmem>>, %arg3: memref<64x128xf32, #tpu.memory_space<vmem>>, %arg4: memref<1x128xf32, #tpu.memory_space<vmem>>, %arg5: memref<1x128xf32, #tpu.memory_space<vmem>>, %arg6: memref<128x128xf32, #tpu.memory_space<vmem>>, %arg7: memref<64x128xf32, #tpu.memory_space<vmem>>, %arg8: memref<1x128xf32, #tpu.memory_space<vmem>>, %arg9: memref<1x128xf32, #tpu.memory_space<vmem>>) attributes {dimension_semantics = [#tpu.dimension_semantics<arbitrary>, #tpu.dimension_semantics<arbitrary>], iteration_bounds = array<i64: 2, 2>, scalar_prefetch = 0 : i64, scratch_operands = 2 : i64, tpu.core_type = #tpu.core_type<tc>, window_params = [{transform_indices = @transform_0, window_bounds = array<i64: 64, 64>}, {pipeline_mode = #tpu.pipeline_mode<synchronous>, transform_indices = @transform_1, window_bounds = array<i64: 64, 128>}, {pipeline_mode = #tpu.pipeline_mode<synchronous>, transform_indices = @transform_2, window_bounds = array<i64: 1, 128>}, {pipeline_mode = #tpu.pipeline_mode<synchronous>, transform_indices = @transform_3, window_bounds = array<i64: 1, 128>}, {pipeline_mode = #tpu.pipeline_mode<synchronous>, transform_indices = @transform_4, window_bounds = array<i64: 128, 128>}, {transform_indices = @transform_5, window_bounds = array<i64: 64, 128>}]} {
    %c0_i32 = arith.constant 0 : i32
    %0 = arith.cmpi eq, %arg0, %c0_i32 : i32
    %c0_i32_0 = arith.constant 0 : i32
    %1 = arith.cmpi eq, %arg1, %c0_i32_0 : i32
    %2 = arith.andi %0, %1 : i1
    %3 = arith.extui %2 : i1 to i32
    %c0_i32_1 = arith.constant 0 : i32
    %4 = arith.cmpi ne, %3, %c0_i32_1 : i32
    scf.if %4 {
      %cst_8 = arith.constant 0.000000e+00 : f32
      %14 = vector.broadcast %cst_8 : f32 to vector<1x128xf32>
      %c0_9 = arith.constant 0 : index
      %c0_10 = arith.constant 0 : index
      %15 = vector.load %arg8[%c0_9, %c0_10] : memref<1x128xf32, #tpu.memory_space<vmem>>, vector<1x128xf32>
      tpu.vector_store %arg8[%c0_9, %c0_10], %14 {strides = array<i32>} : memref<1x128xf32, #tpu.memory_space<vmem>>, vector<1x128xf32>,
      %cst_11 = arith.constant 0.000000e+00 : f32
      %16 = vector.broadcast %cst_11 : f32 to vector<1x128xf32>
      %c0_12 = arith.constant 0 : index
      %c0_13 = arith.constant 0 : index
      %17 = vector.load %arg9[%c0_12, %c0_13] : memref<1x128xf32, #tpu.memory_space<vmem>>, vector<1x128xf32>
      tpu.vector_store %arg9[%c0_12, %c0_13], %16 {strides = array<i32>} : memref<1x128xf32, #tpu.memory_space<vmem>>, vector<1x128xf32>,
    } else {
    }
    %c0 = arith.constant 0 : index
    %c0_2 = arith.constant 0 : index
    %5 = vector.load %arg2[%c0, %c0_2] : memref<64x64xf32, #tpu.memory_space<vmem>>, vector<64x64xf32>
    %c0_3 = arith.constant 0 : index
    %c0_4 = arith.constant 0 : index
    %6 = vector.load %arg3[%c0_3, %c0_4] : memref<64x128xf32, #tpu.memory_space<vmem>>, vector<64x128xf32>
    %cst = arith.constant dense<0.000000e+00> : vector<64x128xf32>
    %7 = tpu.matmul %5, %6, %cst {dimension_numbers = #tpu.dot_dimension_numbers<[1], [0], [0], [1], [0, 0, 1, 1], [], []>} : vector<64x64xf32>, vector<64x128xf32>, vector<64x128xf32> -> vector<64x128xf32>
    %c0_i32_5 = arith.constant 0 : i32
    %8 = arith.cmpi eq, %arg0, %c0_i32_5 : i32
    %9 = arith.extui %8 : i1 to i32
    %c0_i32_6 = arith.constant 0 : i32
    %10 = arith.cmpi ne, %9, %c0_i32_6 : i32
    scf.if %10 {
      %c0_8 = arith.constant 0 : index
      %c0_9 = arith.constant 0 : index
      %14 = vector.load %arg8[%c0_8, %c0_9] : memref<1x128xf32, #tpu.memory_space<vmem>>, vector<1x128xf32>
      %cst_10 = arith.constant dense<0.000000e+00> : vector<128xf32>
      %15 = vector.multi_reduction <add>, %7, %cst_10 [0] : vector<64x128xf32> to vector<128xf32>
      %16 = vector.shape_cast %15 : vector<128xf32> to vector<1x128xf32>
      %17 = arith.addf %14, %16 : vector<1x128xf32>
      %c0_11 = arith.constant 0 : index
      %c0_12 = arith.constant 0 : index
      %18 = vector.load %arg8[%c0_11, %c0_12] : memref<1x128xf32, #tpu.memory_space<vmem>>, vector<1x128xf32>
      tpu.vector_store %arg8[%c0_11, %c0_12], %17 {strides = array<i32>} : memref<1x128xf32, #tpu.memory_space<vmem>>, vector<1x128xf32>,
      %c0_13 = arith.constant 0 : index
      %c0_14 = arith.constant 0 : index
      %19 = vector.load %arg9[%c0_13, %c0_14] : memref<1x128xf32, #tpu.memory_space<vmem>>, vector<1x128xf32>
      %20 = arith.mulf %7, %7 : vector<64x128xf32>
      %cst_15 = arith.constant dense<0.000000e+00> : vector<128xf32>
      %21 = vector.multi_reduction <add>, %20, %cst_15 [0] : vector<64x128xf32> to vector<128xf32>
      %22 = vector.shape_cast %21 : vector<128xf32> to vector<1x128xf32>
      %23 = arith.addf %19, %22 : vector<1x128xf32>
      %c0_16 = arith.constant 0 : index
      %c0_17 = arith.constant 0 : index
      %24 = vector.load %arg9[%c0_16, %c0_17] : memref<1x128xf32, #tpu.memory_space<vmem>>, vector<1x128xf32>
      tpu.vector_store %arg9[%c0_16, %c0_17], %23 {strides = array<i32>} : memref<1x128xf32, #tpu.memory_space<vmem>>, vector<1x128xf32>,
    } else {
    }
    %c1_i32 = arith.constant 1 : i32
    %11 = arith.cmpi eq, %arg0, %c1_i32 : i32
    %12 = arith.extui %11 : i1 to i32
    %c0_i32_7 = arith.constant 0 : i32
    %13 = arith.cmpi ne, %12, %c0_i32_7 : i32
    scf.if %13 {
      %c0_8 = arith.constant 0 : index
      %c0_9 = arith.constant 0 : index
      %14 = vector.load %arg8[%c0_8, %c0_9] : memref<1x128xf32, #tpu.memory_space<vmem>>, vector<1x128xf32>
      %cst_10 = arith.constant 0.010416667 : f32
      %15 = vector.broadcast %cst_10 : f32 to vector<1x128xf32>
      %16 = arith.mulf %14, %15 : vector<1x128xf32>
      %c0_11 = arith.constant 0 : index
      %c0_12 = arith.constant 0 : index
      %17 = vector.load %arg9[%c0_11, %c0_12] : memref<1x128xf32, #tpu.memory_space<vmem>>, vector<1x128xf32>
      %cst_13 = arith.constant 0.010416667 : f32
      %18 = vector.broadcast %cst_13 : f32 to vector<1x128xf32>
      %19 = arith.mulf %17, %18 : vector<1x128xf32>
      %20 = arith.mulf %16, %16 : vector<1x128xf32>
      %21 = arith.subf %19, %20 : vector<1x128xf32>
      %c0_14 = arith.constant 0 : index
      %c0_15 = arith.constant 0 : index
      %22 = vector.load %arg4[%c0_14, %c0_15] : memref<1x128xf32, #tpu.memory_space<vmem>>, vector<1x128xf32>
      %cst_16 = arith.constant 9.99999974E-6 : f32
      %23 = vector.broadcast %cst_16 : f32 to vector<1x128xf32>
      %24 = arith.addf %21, %23 : vector<1x128xf32>
      %25 = math.rsqrt %24 : vector<1x128xf32>
      %26 = arith.mulf %22, %25 : vector<1x128xf32>
      %c0_17 = arith.constant 0 : index
      %c0_18 = arith.constant 0 : index
      %27 = vector.load %arg5[%c0_17, %c0_18] : memref<1x128xf32, #tpu.memory_space<vmem>>, vector<1x128xf32>
      %28 = arith.mulf %16, %26 : vector<1x128xf32>
      %29 = arith.subf %27, %28 : vector<1x128xf32>
      %30 = vector.broadcast %26 : vector<1x128xf32> to vector<64x128xf32>
      %31 = arith.mulf %7, %30 : vector<64x128xf32>
      %32 = vector.broadcast %29 : vector<1x128xf32> to vector<64x128xf32>
      %33 = arith.addf %31, %32 : vector<64x128xf32>
      %cst_19 = arith.constant 0.000000e+00 : f32
      %34 = vector.broadcast %cst_19 : f32 to vector<64x128xf32>
      %35 = arith.maximumf %33, %34 : vector<64x128xf32>
      %c0_20 = arith.constant 0 : index
      %c0_21 = arith.constant 0 : index
      %36 = vector.load %arg6[%c0_20, %c0_21] : memref<128x128xf32, #tpu.memory_space<vmem>>, vector<128x128xf32>
      %cst_22 = arith.constant dense<0.000000e+00> : vector<64x128xf32>
      %37 = tpu.matmul %35, %36, %cst_22 {dimension_numbers = #tpu.dot_dimension_numbers<[1], [0], [0], [1], [0, 0, 1, 1], [], []>} : vector<64x128xf32>, vector<128x128xf32>, vector<64x128xf32> -> vector<64x128xf32>
      %c0_23 = arith.constant 0 : index
      %c0_24 = arith.constant 0 : index
      %38 = vector.load %arg7[%c0_23, %c0_24] : memref<64x128xf32, #tpu.memory_space<vmem>>, vector<64x128xf32>
      tpu.vector_store %arg7[%c0_23, %c0_24], %37 {strides = array<i32>} : memref<64x128xf32, #tpu.memory_space<vmem>>, vector<64x128xf32>,
    } else {
    }
    return
  }
  func.func @transform_0(%arg0: i32, %arg1: i32) -> (i32, i32) {
    %c0_i32 = arith.constant 0 : i32
    %c0_i32_0 = arith.constant 0 : i32
    return %arg1, %c0_i32 : i32, i32
  }
  func.func @transform_1(%arg0: i32, %arg1: i32) -> (i32, i32) {
    %c0_i32 = arith.constant 0 : i32
    %c0_i32_0 = arith.constant 0 : i32
    %c0_i32_1 = arith.constant 0 : i32
    return %c0_i32, %c0_i32_0 : i32, i32
  }
  func.func @transform_2(%arg0: i32, %arg1: i32) -> (i32, i32) {
    %c0_i32 = arith.constant 0 : i32
    %c0_i32_0 = arith.constant 0 : i32
    %c0_i32_1 = arith.constant 0 : i32
    return %c0_i32, %c0_i32_0 : i32, i32
  }
  func.func @transform_3(%arg0: i32, %arg1: i32) -> (i32, i32) {
    %c0_i32 = arith.constant 0 : i32
    %c0_i32_0 = arith.constant 0 : i32
    %c0_i32_1 = arith.constant 0 : i32
    return %c0_i32, %c0_i32_0 : i32, i32
  }
  func.func @transform_4(%arg0: i32, %arg1: i32) -> (i32, i32) {
    %c0_i32 = arith.constant 0 : i32
    %c0_i32_0 = arith.constant 0 : i32
    %c0_i32_1 = arith.constant 0 : i32
    return %c0_i32, %c0_i32_0 : i32, i32
  }
  func.func @transform_5(%arg0: i32, %arg1: i32) -> (i32, i32) {
    %c0_i32 = arith.constant 0 : i32
    %c0_i32_0 = arith.constant 0 : i32
    return %arg1, %c0_i32 : i32, i32
  }
}

</mosaic_0001>

<llo_original>
// kernel: tpu_custom_call.1
$region0: #{tpu_custom_call.1}
  #allocation0 [shape = 'u32[]', space=smem, size = 0x4, offset = 0x4, fixed_abs, tag = 'smem constant byte address 0x4 - core index']
  #allocation1 [shape = 'u32[144,128]{1,0:T(1,128)}', space=vmem, size = 0x12000, scoped, tag = 'internal scratch']
  #allocation2 [shape = 'f32[1,128]{1,0:T(1,128)}', space=vmem, size = 0x200, scoped, tag = 'scratch operand']
  #allocation3 [shape = 'f32[1,128]{1,0:T(1,128)}', space=vmem, size = 0x200, scoped, tag = 'scratch operand']
  %s0 = inlined_call_operand.vmem [shape: f32[128,64], index: 0, kind: input, shape index: {}]
  %s1 = inlined_call_operand.vmem [shape: f32[64,128], index: 1, kind: input, shape index: {}]
  %s2 = inlined_call_operand.vmem [shape: f32[1,128], index: 2, kind: input, shape index: {}]
  %s3 = inlined_call_operand.vmem [shape: f32[1,128], index: 3, kind: input, shape index: {}]
  %s4 = inlined_call_operand.vmem [shape: f32[128,128], index: 4, kind: input, shape index: {}]
  %s5 = inlined_call_operand.hbm [shape: f32[128,128], index: 5, kind: output, shape index: {}]
  %s6 = sld [smem:[#allocation0]]
  $region65: #{tpu_custom_call.1} parent=0
    _
  %s8 = ssub.s32 1, %s6
  %s9 = scalar_select 0, %s8, %s6
  $region1: #{tpu_custom_call.1} parent=0
    #allocation4 [shape = 'u8[65536]{0}', space=vmem, size = 0x10000, scoped, tag = 'output window, operand 0']
    #allocation5 [shape = 's32[2]{0}', space=sflag, size = 0x8, scoped, tag = 'scoped memory for tpu_custom_call.1']
    %10 = vsyncpa [#allocation5], 0
    %s11 = scalar_lea.sflag [#allocation5], 1
    %12 = vsyncpa %s11, 0
    loop: start=0, step=1, limit=6
    $region2: #{tpu_custom_call.1} parent=1 // loop_pre_header
      _
    $region3: #{tpu_custom_call.1} parent=1 // loop_header
      %s14 = sphi 0, %s18
      %p15 = scmp.ge.s32.totalorder %s14, 6
      %s21 = sphi 0, %s33
      %s22 = sphi 0, %s29
      %s23 = sphi 0, %s21
      %s24 = sphi 0, %s22
      %s25 = sphi 0, %s23
      %s26 = sphi 0, %s24
      %s36 = sphi 0, %s38
      %s39 = sphi 0, %s36
      %s40 = sphi 0, %s39
      %s56 = sphi 0, %s40
      %s60 = sphi 0, %s60
      %s62 = sphi 0, %s60
      %s63 = sphi 0, %s62
      %s77 = sphi 0, %s63
      %s81 = sphi 0, %s81
      %s83 = sphi 0, %s81
      %s84 = sphi 0, %s83
      %s98 = sphi 0, %s84
      %s102 = sphi 0, %s102
      %s104 = sphi 0, %s102
      %s105 = sphi 0, %s104
      %s119 = sphi 0, %s105
      %s123 = sphi 0, %s123
      %s125 = sphi 0, %s123
      %s126 = sphi 0, %s125
      %s140 = sphi 0, %s126
      %s146 = sphi 0, %s148
      %s149 = sphi 0, %s146
      %s150 = sphi 0, %s149
      %s166 = sphi 0, %s150
    $region4: #{tpu_custom_call.1} parent=1 // loop_header_branch
      %17 = sbr.rel (%p15) target = $region8
    $region5: #{tpu_custom_call.1} parent=1 // loop_body
      %s19 = ssub.s32 %s14, 1
      %s20 = ssub.s32 %s14, 2
      %s27 = sadd.s32 1, %s22
      %p28 = scmp.ge.s32.totalorder %s27, 2
      %s29 = scalar_select %p28, 0, %s27
      %s30 = sadd.s32 1, %s21
      %s31 = scalar_select %p28, %s30, %s21
      %p32 = scmp.ge.s32.totalorder %s31, 2
      %s33 = scalar_select %p32, 0, %s31
      %s34 = ssub.s32 %s22, %s29
      %p35 = scmp.eq.s32.totalorder %s34, 0
      %s37 = sadd.s32 %s36, 1
      %s38 = scalar_select %p35, %s36, %s37
      %p41 = pneg %p35
      %p42 = scmp.eq.s32.totalorder %s14, 3
      %p43 = por %p41, %p42
      %p44 = scmp.ne.s32.totalorder %s36, %s39
      %p45 = scmp.eq.s32.totalorder %s14, 0
      %p46 = por %p44, %p45
      %p47 = scmp.ne.s32.totalorder %s36, %s39
      %p48 = scmp.eq.s32.totalorder %s19, 3
      %p49 = por %p47, %p48
      %p50 = scmp.ne.s32.totalorder %s39, %s40
      %p51 = scmp.eq.s32.totalorder %s19, 0
      %p52 = por %p50, %p51
      %p53 = scmp.ne.s32.totalorder %s39, %s40
      %p54 = scmp.eq.s32.totalorder %s20, 3
      %p55 = por %p53, %p54
      %p57 = scmp.ne.s32.totalorder %s40, %s56
      %p58 = scmp.eq.s32.totalorder %s20, 0
      %p59 = por %p57, %p58
      %s61 = sadd.s32 %s60, 1
      %p64 = scmp.eq.s32.totalorder %s14, 3
      %p65 = scmp.ne.s32.totalorder %s60, %s62
      %p66 = scmp.eq.s32.totalorder %s14, 0
      %p67 = por %p65, %p66
      %p68 = scmp.ne.s32.totalorder %s60, %s62
      %p69 = scmp.eq.s32.totalorder %s19, 3
      %p70 = por %p68, %p69
      %p71 = scmp.ne.s32.totalorder %s62, %s63
      %p72 = scmp.eq.s32.totalorder %s19, 0
      %p73 = por %p71, %p72
      %p74 = scmp.ne.s32.totalorder %s62, %s63
      %p75 = scmp.eq.s32.totalorder %s20, 3
      %p76 = por %p74, %p75
      %p78 = scmp.ne.s32.totalorder %s63, %s77
      %p79 = scmp.eq.s32.totalorder %s20, 0
      %p80 = por %p78, %p79
      %s82 = sadd.s32 %s81, 1
      %p85 = scmp.eq.s32.totalorder %s14, 3
      %p86 = scmp.ne.s32.totalorder %s81, %s83
      %p87 = scmp.eq.s32.totalorder %s14, 0
      %p88 = por %p86, %p87
      %p89 = scmp.ne.s32.totalorder %s81, %s83
      %p90 = scmp.eq.s32.totalorder %s19, 3
      %p91 = por %p89, %p90
      %p92 = scmp.ne.s32.totalorder %s83, %s84
      %p93 = scmp.eq.s32.totalorder %s19, 0
      %p94 = por %p92, %p93
      %p95 = scmp.ne.s32.totalorder %s83, %s84
      %p96 = scmp.eq.s32.totalorder %s20, 3
      %p97 = por %p95, %p96
      %p99 = scmp.ne.s32.totalorder %s84, %s98
      %p100 = scmp.eq.s32.totalorder %s20, 0
      %p101 = por %p99, %p100
      %s103 = sadd.s32 %s102, 1
      %p106 = scmp.eq.s32.totalorder %s14, 3
      %p107 = scmp.ne.s32.totalorder %s102, %s104
      %p108 = scmp.eq.s32.totalorder %s14, 0
      %p109 = por %p107, %p108
      %p110 = scmp.ne.s32.totalorder %s102, %s104
      %p111 = scmp.eq.s32.totalorder %s19, 3
      %p112 = por %p110, %p111
      %p113 = scmp.ne.s32.totalorder %s104, %s105
      %p114 = scmp.eq.s32.totalorder %s19, 0
      %p115 = por %p113, %p114
      %p116 = scmp.ne.s32.totalorder %s104, %s105
      %p117 = scmp.eq.s32.totalorder %s20, 3
      %p118 = por %p116, %p117
      %p120 = scmp.ne.s32.totalorder %s105, %s119
      %p121 = scmp.eq.s32.totalorder %s20, 0
      %p122 = por %p120, %p121
      %s124 = sadd.s32 %s123, 1
      %p127 = scmp.eq.s32.totalorder %s14, 3
      %p128 = scmp.ne.s32.totalorder %s123, %s125
      %p129 = scmp.eq.s32.totalorder %s14, 0
      %p130 = por %p128, %p129
      %p131 = scmp.ne.s32.totalorder %s123, %s125
      %p132 = scmp.eq.s32.totalorder %s19, 3
      %p133 = por %p131, %p132
      %p134 = scmp.ne.s32.totalorder %s125, %s126
      %p135 = scmp.eq.s32.totalorder %s19, 0
      %p136 = por %p134, %p135
      %p137 = scmp.ne.s32.totalorder %s125, %s126
      %p138 = scmp.eq.s32.totalorder %s20, 3
      %p139 = por %p137, %p138
      %p141 = scmp.ne.s32.totalorder %s126, %s140
      %p142 = scmp.eq.s32.totalorder %s20, 0
      %p143 = por %p141, %p142
      %s144 = ssub.s32 %s22, %s29
      %p145 = scmp.eq.s32.totalorder %s144, 0
      %s147 = sadd.s32 %s146, 1
      %s148 = scalar_select %p145, %s146, %s147
      %p151 = pneg %p145
      %p152 = scmp.eq.s32.totalorder %s14, 3
      %p153 = por %p151, %p152
      %p154 = scmp.ne.s32.totalorder %s146, %s149
      %p155 = scmp.eq.s32.totalorder %s14, 0
      %p156 = por %p154, %p155
      %p157 = scmp.ne.s32.totalorder %s146, %s149
      %p158 = scmp.eq.s32.totalorder %s19, 3
      %p159 = por %p157, %p158
      %p160 = scmp.ne.s32.totalorder %s149, %s150
      %p161 = scmp.eq.s32.totalorder %s19, 0
      %p162 = por %p160, %p161
      %p163 = scmp.ne.s32.totalorder %s149, %s150
      %p164 = scmp.eq.s32.totalorder %s20, 3
      %p165 = por %p163, %p164
      %p167 = scmp.ne.s32.totalorder %s150, %s166
      %p168 = scmp.eq.s32.totalorder %s20, 0
      %p169 = por %p167, %p168
      %p170 = scmp.le.s32.totalorder 1, %s14
      %p171 = scmp.lt.s32.totalorder %s14, 5
      %p172 = pnand %p170, %p171
      %p173 = pneg %p172
      // Predicated region
      $region9: #{tpu_custom_call.1} parent=5 // pred_check
        _
      $region10: #{tpu_custom_call.1} parent=5 // pred_check_branch
        %175 = sbr.rel (%p172) target = $region12
      $region11: #{tpu_custom_call.1} parent=5 // pred_region
        %s176 = ssub.s32 %s14, 1
        // Predicated region
        $region13: #{tpu_custom_call.1} parent=11 // pred_check
          %p177 = pneg %p73
        $region14: #{tpu_custom_call.1} parent=11 // pred_check_branch
          %179 = sbr.rel (%p177) target = $region16
        $region15: #{tpu_custom_call.1} parent=11 // pred_region
          _
        $region16: #{tpu_custom_call.1} parent=11 // pred_fallthru
          _
        // Predicated region
        $region17: #{tpu_custom_call.1} parent=11 // pred_check
          %p180 = pneg %p94
        $region18: #{tpu_custom_call.1} parent=11 // pred_check_branch
          %182 = sbr.rel (%p180) target = $region20
        $region19: #{tpu_custom_call.1} parent=11 // pred_region
          _
        $region20: #{tpu_custom_call.1} parent=11 // pred_fallthru
          _
        // Predicated region
        $region21: #{tpu_custom_call.1} parent=11 // pred_check
          %p183 = pneg %p115
        $region22: #{tpu_custom_call.1} parent=11 // pred_check_branch
          %185 = sbr.rel (%p183) target = $region24
        $region23: #{tpu_custom_call.1} parent=11 // pred_region
          _
        $region24: #{tpu_custom_call.1} parent=11 // pred_fallthru
          _
        // Predicated region
        $region25: #{tpu_custom_call.1} parent=11 // pred_check
          %p186 = pneg %p136
        $region26: #{tpu_custom_call.1} parent=11 // pred_check_branch
          %188 = sbr.rel (%p186) target = $region28
        $region27: #{tpu_custom_call.1} parent=11 // pred_region
          _
        $region28: #{tpu_custom_call.1} parent=11 // pred_fallthru
          _
      $region12: #{tpu_custom_call.1} parent=5 // pred_fallthru
        _
      %p189 = scmp.lt.s32.totalorder %s14, 4
      // Predicated region
      $region29: #{tpu_custom_call.1} parent=5 // pred_check
        %p190 = pneg %p189
      $region30: #{tpu_custom_call.1} parent=5 // pred_check_branch
        %192 = sbr.rel (%p190) target = $region32
      $region31: #{tpu_custom_call.1} parent=5 // pred_region
        // Predicated region
        $region33: #{tpu_custom_call.1} parent=31 // pred_check
          %p193 = pneg %p46
        $region34: #{tpu_custom_call.1} parent=31 // pred_check_branch
          %195 = sbr.rel (%p193) target = $region36
        $region35: #{tpu_custom_call.1} parent=31 // pred_region
          %s196 = smul.u32 8, %s22
          %p197 = scmp.lt.s32.totalorder %s196, 15
          %s198 = scalar_select %p197, %s196, 15
          %s199 = smul.addr %s198, 8
          %s200 = scalar_lea.vmem %s0, %s199
          %s201 = smul.u32 8, %s22
        $region36: #{tpu_custom_call.1} parent=31 // pred_fallthru
          _
      $region32: #{tpu_custom_call.1} parent=5 // pred_fallthru
        _
      %p202 = scmp.le.s32.totalorder 1, %s14
      %p203 = scmp.lt.s32.totalorder %s14, 5
      %p204 = pnand %p202, %p203
      %p205 = pneg %p204
      // Predicated region
      $region37: #{tpu_custom_call.1} parent=5 // pred_check
        _
      $region38: #{tpu_custom_call.1} parent=5 // pred_check_branch
        %207 = sbr.rel (%p204) target = $region40
      $region39: #{tpu_custom_call.1} parent=5 // pred_region
        %s208 = ssub.s32 %s14, 1
        %s209 = smul.u32 8, %s24
        %p210 = scmp.lt.s32.totalorder %s209, 15
        %s211 = scalar_select %p210, %s209, 15
        %s212 = smul.addr %s211, 8
        %s213 = scalar_lea.vmem %s0, %s212
        %p214 = pneg %p52
        %p215 = pneg %p49
        %p216 = pneg %p73
        %p217 = pneg %p70
        %p218 = pneg %p94
        %p219 = pneg %p91
        %p220 = pneg %p115
        %p221 = pneg %p112
        %p222 = pneg %p136
        %p223 = pneg %p133
        %p224 = pneg %p162
        %p225 = pneg %p159
        %s226 = sand.u32 %s149, 1
        %s227 = scalar_lea.sflag [#allocation5], %s226
        %s228 = sand.u32 %s149, 1
        %s229 = smul.addr %s228, 64
        %s230 = scalar_lea.vmem [#allocation4], %s229
        %s231 = smul.u32 8, %s24
        %p232 = scmp.lt.s32.totalorder %s231, 15
        %s233 = scalar_select %p232, %s231, 15
        %s234 = smul.addr %s233, 8
        %s235 = scalar_lea.vmem %s0, %s234
        %s236 = smul.u32 8, %s24
        %s237 = smul.u32 8, %s24
        %p238 = scmp.eq.s32.totalorder %s23, 0
        %p239 = scmp.eq.s32.totalorder %s24, 0
        %p240 = pnand %p238, %p239
        %p241 = pneg %p240
        // Predicated region
        $region41: #{tpu_custom_call.1} parent=39 // pred_check
          _
        $region42: #{tpu_custom_call.1} parent=39 // pred_check_branch
          %243 = sbr.rel (%p240) target = $region44
        $region43: #{tpu_custom_call.1} parent=39 // pred_region
          %244 = vst [vmem:[#allocation2] sm:$0x1] 0.0
          %245 = vst [vmem:[#allocation3] sm:$0x1] 0.0
        $region44: #{tpu_custom_call.1} parent=39 // pred_fallthru
          _
        %v246 = vld [vmem:[%s235] sm:$0xff]
        %v247 = vld [vmem:[%s235 + $0x8] sm:$0xff]
        %v248 = vld [vmem:[%s235 + $0x10] sm:$0xff]
        %v249 = vld [vmem:[%s235 + $0x18] sm:$0xff]
        %v250 = vld [vmem:[%s235 + $0x20] sm:$0xff]
        %v251 = vld [vmem:[%s235 + $0x28] sm:$0xff]
        %v252 = vld [vmem:[%s235 + $0x30] sm:$0xff]
        %v253 = vld [vmem:[%s235 + $0x38] sm:$0xff]
        %v254 = vld [vmem:[%s1] sm:$0xff]
        %v255 = vld [vmem:[%s1 + $0x8] sm:$0xff]
        %v256 = vld [vmem:[%s1 + $0x10] sm:$0xff]
        %v257 = vld [vmem:[%s1 + $0x18] sm:$0xff]
        %v258 = vld [vmem:[%s1 + $0x20] sm:$0xff]
        %v259 = vld [vmem:[%s1 + $0x28] sm:$0xff]
        %v260 = vld [vmem:[%s1 + $0x30] sm:$0xff]
        %v261 = vld [vmem:[%s1 + $0x38] sm:$0xff]
        %vm262 = vcmask 523264
        %v264 = vsel %vm262, %v246, 0
        %v267 = vsel %vm262, %v247, 0
        %v270 = vsel %vm262, %v248, 0
        %v273 = vsel %vm262, %v249, 0
        %v276 = vsel %vm262, %v250, 0
        %v279 = vsel %vm262, %v251, 0
        %v282 = vsel %vm262, %v252, 0
        %v285 = vsel %vm262, %v253, 0
        %287 = vmatprep.subr.mxu0 0.0
        %288 = vmatpush1.msra.mxu0 %v254
        %289 = vmatprep.subr.mxu0 0.0
        %290 = vmatpush1.msra.mxu0 %v255
        %291 = vmatprep.subr.mxu0 0.0
        %292 = vmatpush1.msra.mxu0 %v256
        %293 = vmatprep.subr.mxu0 0.0
        %294 = vmatpush1.msra.mxu0 %v257
        %295 = vmatprep.subr.mxu0 0.0
        %296 = vmatpush1.msra.mxu0 %v258
        %297 = vmatprep.subr.mxu0 0.0
        %298 = vmatpush1.msra.mxu0 %v259
        %299 = vmatprep.subr.mxu0 0.0
        %300 = vmatpush1.msra.mxu0 %v260
        %301 = vmatprep.subr.mxu0 0.0
        %302 = vmatpush1.msra.mxu0 %v261
        %303 = vmatprep.subr.mxu0 0.0
        %304 = vmatpush1.msra.mxu0 0.0
        %305 = vmatprep.subr.mxu0 0.0
        %306 = vmatpush1.msra.mxu0 0.0
        %307 = vmatprep.subr.mxu0 0.0
        %308 = vmatpush1.msra.mxu0 0.0
        %309 = vmatprep.subr.mxu0 0.0
        %310 = vmatpush1.msra.mxu0 0.0
        %311 = vmatprep.subr.mxu0 0.0
        %312 = vmatpush1.msra.mxu0 0.0
        %313 = vmatprep.subr.mxu0 0.0
        %314 = vmatpush1.msra.mxu0 0.0
        %315 = vmatprep.subr.mxu0 0.0
        %316 = vmatpush1.msra.mxu0 0.0
        %317 = vmatprep.subr.mxu0 0.0
        %318 = vmatpush1.msra.mxu0 0.0
        %319 = vmatprep.subr.mxu0 0.0
        %320 = vmatpush1.msra.mxu0 0.0
        %321 = vmatprep.subr.mxu0 0.0
        %322 = vmatpush1.msra.mxu0 0.0
        %323 = vmatprep.subr.mxu0 0.0
        %324 = vmatpush1.msra.mxu0 0.0
        %325 = vmatprep.subr.mxu0 0.0
        %326 = vmatpush1.msra.mxu0 0.0
        %327 = vmatprep.subr.mxu0 0.0
        %328 = vmatpush1.msra.mxu0 0.0
        %329 = vmatprep.subr.mxu0 0.0
        %330 = vmatpush1.msra.mxu0 0.0
        %331 = vmatprep.subr.mxu0 0.0
        %332 = vmatpush1.msra.mxu0 0.0
        %333 = vmatprep.subr.mxu0 0.0
        %334 = vmatpush1.msra.mxu0 0.0
        %335 = vmatprep.subr.mxu0 0.0
        %336 = vmatpush1.msra.mxu0 0.0
        %337 = vmatprep.subr.mxu0 0.0
        %338 = vmatpush1.msra.mxu0 0.0
        %339 = vmatprep.subr.mxu0 0.0
        %340 = vmatpush1.msra.mxu0 0.0
        %341 = vmatprep.subr.mxu0 0.0
        %342 = vmatpush1.msra.mxu0 0.0
        %343 = vmatprep.subr.mxu0 0.0
        %344 = vmatpush1.msra.mxu0 0.0
        %345 = vmatprep.subr.mxu0 0.0
        %346 = vmatpush1.msra.mxu0 0.0
        %347 = vmatprep.subr.mxu0 0.0
        %348 = vmatpush1.msra.mxu0 0.0
        %349 = vmatprep.subr.mxu0 0.0
        %350 = vmatpush1.msra.mxu0 0.0
        %351 = vmatprep.mubr.f32.mxu0 0.0
        %352 = vmatmul.mubr.f32.gmra.mrb[0].mxu0 %v264
        %v353 = vpop.f32.mrb[0].mxu0
        %v354 = vadd.f32 0.0, %v353
        %v355 = vpop.f32.mrb[0].mxu0
        %356 = vmatprep.mubr.f32.mxu0 0.0
        %357 = vmatmul.mubr.f32.gmra.mrb[0].mxu0 %v267
        %v358 = vpop.f32.mrb[0].mxu0
        %v359 = vadd.f32 0.0, %v358
        %v360 = vpop.f32.mrb[0].mxu0
        %361 = vmatprep.mubr.f32.mxu0 0.0
        %362 = vmatmul.mubr.f32.gmra.mrb[0].mxu0 %v270
        %v363 = vpop.f32.mrb[0].mxu0
        %v364 = vadd.f32 0.0, %v363
        %v365 = vpop.f32.mrb[0].mxu0
        %366 = vmatprep.mubr.f32.mxu0 0.0
        %367 = vmatmul.mubr.f32.gmra.mrb[0].mxu0 %v273
        %v368 = vpop.f32.mrb[0].mxu0
        %v369 = vadd.f32 0.0, %v368
        %v370 = vpop.f32.mrb[0].mxu0
        %371 = vmatprep.mubr.f32.mxu0 0.0
        %372 = vmatmul.mubr.f32.gmra.mrb[0].mxu0 %v276
        %v373 = vpop.f32.mrb[0].mxu0
        %v374 = vadd.f32 0.0, %v373
        %v375 = vpop.f32.mrb[0].mxu0
        %376 = vmatprep.mubr.f32.mxu0 0.0
        %377 = vmatmul.mubr.f32.gmra.mrb[0].mxu0 %v279
        %v378 = vpop.f32.mrb[0].mxu0
        %v379 = vadd.f32 0.0, %v378
        %v380 = vpop.f32.mrb[0].mxu0
        %381 = vmatprep.mubr.f32.mxu0 0.0
        %382 = vmatmul.mubr.f32.gmra.mrb[0].mxu0 %v282
        %v383 = vpop.f32.mrb[0].mxu0
        %v384 = vadd.f32 0.0, %v383
        %v385 = vpop.f32.mrb[0].mxu0
        %386 = vmatprep.mubr.f32.mxu0 0.0
        %387 = vmatmul.mubr.f32.gmra.mrb[0].mxu0 %v285
        %v388 = vpop.f32.mrb[0].mxu0
        %v389 = vadd.f32 0.0, %v388
        %v390 = vpop.f32.mrb[0].mxu0
        %391 = vdwg.mxu0
        // Predicated region
        $region45: #{tpu_custom_call.1} parent=39 // pred_check
          %p392 = pneg %p238
        $region46: #{tpu_custom_call.1} parent=39 // pred_check_branch
          %394 = sbr.rel (%p392) target = $region48
        $region47: #{tpu_custom_call.1} parent=39 // pred_region
          %v395 = vld [vmem:[#allocation2] sm:$0x1]
          %v396 = vadd.f32 %v354, %v359
          %v397 = vadd.f32 %v396, %v364
          %v398 = vadd.f32 %v397, %v369
          %v399 = vadd.f32 %v398, %v374
          %v400 = vadd.f32 %v399, %v379
          %v401 = vadd.f32 %v400, %v384
          %v402 = vadd.f32 %v401, %v389
          %v403 = vrot.slane %v402, 4
          %v404 = vadd.f32 %v402, %v403
          %v405 = vrot.slane %v404, 2
          %v406 = vadd.f32 %v404, %v405
          %v407 = vrot.slane %v406, 1
          %v408 = vadd.f32 %v406, %v407
          %v409 = vadd.f32 %v395, %v408
          %410 = vst [vmem:[#allocation2] sm:$0x1] %v409
          %v411 = vld [vmem:[#allocation3] sm:$0x1]
          %v412 = vmul.f32 %v354, %v354
          %v413 = vmul.f32 %v359, %v359
          %v414 = vmul.f32 %v364, %v364
          %v415 = vmul.f32 %v369, %v369
          %v416 = vmul.f32 %v374, %v374
          %v417 = vmul.f32 %v379, %v379
          %v418 = vmul.f32 %v384, %v384
          %v419 = vmul.f32 %v389, %v389
          %v420 = vadd.f32 %v412, %v413
          %v421 = vadd.f32 %v420, %v414
          %v422 = vadd.f32 %v421, %v415
          %v423 = vadd.f32 %v422, %v416
          %v424 = vadd.f32 %v423, %v417
          %v425 = vadd.f32 %v424, %v418
          %v426 = vadd.f32 %v425, %v419
          %v427 = vrot.slane %v426, 4
          %v428 = vadd.f32 %v426, %v427
          %v429 = vrot.slane %v428, 2
          %v430 = vadd.f32 %v428, %v429
          %v431 = vrot.slane %v430, 1
          %v432 = vadd.f32 %v430, %v431
          %v433 = vadd.f32 %v411, %v432
          %434 = vst [vmem:[#allocation3] sm:$0x1] %v433
        $region48: #{tpu_custom_call.1} parent=39 // pred_fallthru
          _
        %p435 = scmp.eq.s32.totalorder %s23, 1
        // Predicated region
        $region49: #{tpu_custom_call.1} parent=39 // pred_check
          %p436 = pneg %p435
        $region50: #{tpu_custom_call.1} parent=39 // pred_check_branch
          %438 = sbr.rel (%p436) target = $region52
        $region51: #{tpu_custom_call.1} parent=39 // pred_region
          %v439 = vld [vmem:[#allocation2] sm:$0x1]
          %v440 = vmul.f32 %v439, 0.010416667
          %v441 = vld [vmem:[#allocation3] sm:$0x1]
          %v442 = vmul.f32 %v441, 0.010416667
          %v443 = vmul.f32 %v440, %v440
          %v444 = vsub.f32 %v442, %v443
          %v445 = vld [vmem:[%s2] sm:$0x1]
          %v446 = vadd.f32 %v444, 1e-05
          %v447 = vrsqrt.pop %v446
          %v448 = vmul.f32 %v445, %v447
          %v449 = vld [vmem:[%s3] sm:$0x1]
          %v450 = vmul.f32 %v440, %v448
          %v451 = vsub.f32 %v449, %v450
          %v453 = vlaneseq
          %v454 = vshrl.u32 %v453, 7
          %v455 = vsub.s32 0, %v454
          %v456 = vrot.slane %v448, %v455
          %v458 = vmul.f32 %v354, %v456
          %v459 = vmul.f32 %v359, %v456
          %v460 = vmul.f32 %v364, %v456
          %v461 = vmul.f32 %v369, %v456
          %v462 = vmul.f32 %v374, %v456
          %v463 = vmul.f32 %v379, %v456
          %v464 = vmul.f32 %v384, %v456
          %v465 = vmul.f32 %v389, %v456
          %v467 = vlaneseq
          %v468 = vshrl.u32 %v467, 7
          %v469 = vsub.s32 0, %v468
          %v470 = vrot.slane %v451, %v469
          %v472 = vadd.f32 %v458, %v470
          %v473 = vadd.f32 %v459, %v470
          %v474 = vadd.f32 %v460, %v470
          %v475 = vadd.f32 %v461, %v470
          %v476 = vadd.f32 %v462, %v470
          %v477 = vadd.f32 %v463, %v470
          %v478 = vadd.f32 %v464, %v470
          %v479 = vadd.f32 %v465, %v470
          %v480 = vmax.f32 %v472, 0.0
          %v481 = vmax.f32 %v473, 0.0
          %v482 = vmax.f32 %v474, 0.0
          %v483 = vmax.f32 %v475, 0.0
          %v484 = vmax.f32 %v476, 0.0
          %v485 = vmax.f32 %v477, 0.0
          %v486 = vmax.f32 %v478, 0.0
          %v487 = vmax.f32 %v479, 0.0
          %v488 = vld [vmem:[%s4] sm:$0xff]
          %v489 = vld [vmem:[%s4 + $0x8] sm:$0xff]
          %v490 = vld [vmem:[%s4 + $0x10] sm:$0xff]
          %v491 = vld [vmem:[%s4 + $0x18] sm:$0xff]
          %v492 = vld [vmem:[%s4 + $0x20] sm:$0xff]
          %v493 = vld [vmem:[%s4 + $0x28] sm:$0xff]
          %v494 = vld [vmem:[%s4 + $0x30] sm:$0xff]
          %v495 = vld [vmem:[%s4 + $0x38] sm:$0xff]
          %v496 = vld [vmem:[%s4 + $0x40] sm:$0xff]
          %v497 = vld [vmem:[%s4 + $0x48] sm:$0xff]
          %v498 = vld [vmem:[%s4 + $0x50] sm:$0xff]
          %v499 = vld [vmem:[%s4 + $0x58] sm:$0xff]
          %v500 = vld [vmem:[%s4 + $0x60] sm:$0xff]
          %v501 = vld [vmem:[%s4 + $0x68] sm:$0xff]
          %v502 = vld [vmem:[%s4 + $0x70] sm:$0xff]
          %v503 = vld [vmem:[%s4 + $0x78] sm:$0xff]
          %504 = vmatprep.subr.mxu0 0.0
          %505 = vmatpush1.msra.mxu0 %v488
          %506 = vmatprep.subr.mxu0 0.0
          %507 = vmatpush1.msra.mxu0 %v489
          %508 = vmatprep.subr.mxu0 0.0
          %509 = vmatpush1.msra.mxu0 %v490
          %510 = vmatprep.subr.mxu0 0.0
          %511 = vmatpush1.msra.mxu0 %v491
          %512 = vmatprep.subr.mxu0 0.0
          %513 = vmatpush1.msra.mxu0 %v492
          %514 = vmatprep.subr.mxu0 0.0
          %515 = vmatpush1.msra.mxu0 %v493
          %516 = vmatprep.subr.mxu0 0.0
          %517 = vmatpush1.msra.mxu0 %v494
          %518 = vmatprep.subr.mxu0 0.0
          %519 = vmatpush1.msra.mxu0 %v495
          %520 = vmatprep.subr.mxu0 0.0
          %521 = vmatpush1.msra.mxu0 %v496
          %522 = vmatprep.subr.mxu0 0.0
          %523 = vmatpush1.msra.mxu0 %v497
          %524 = vmatprep.subr.mxu0 0.0
          %525 = vmatpush1.msra.mxu0 %v498
          %526 = vmatprep.subr.mxu0 0.0
          %527 = vmatpush1.msra.mxu0 %v499
          %528 = vmatprep.subr.mxu0 0.0
          %529 = vmatpush1.msra.mxu0 %v500
          %530 = vmatprep.subr.mxu0 0.0
          %531 = vmatpush1.msra.mxu0 %v501
          %532 = vmatprep.subr.mxu0 0.0
          %533 = vmatpush1.msra.mxu0 %v502
          %534 = vmatprep.subr.mxu0 0.0
          %535 = vmatpush1.msra.mxu0 %v503
          %536 = vmatprep.subr.mxu0 0.0
          %537 = vmatpush1.msra.mxu0 0.0
          %538 = vmatprep.subr.mxu0 0.0
          %539 = vmatpush1.msra.mxu0 0.0
          %540 = vmatprep.subr.mxu0 0.0
          %541 = vmatpush1.msra.mxu0 0.0
          %542 = vmatprep.subr.mxu0 0.0
          %543 = vmatpush1.msra.mxu0 0.0
          %544 = vmatprep.subr.mxu0 0.0
          %545 = vmatpush1.msra.mxu0 0.0
          %546 = vmatprep.subr.mxu0 0.0
          %547 = vmatpush1.msra.mxu0 0.0
          %548 = vmatprep.subr.mxu0 0.0
          %549 = vmatpush1.msra.mxu0 0.0
          %550 = vmatprep.subr.mxu0 0.0
          %551 = vmatpush1.msra.mxu0 0.0
          %552 = vmatprep.subr.mxu0 0.0
          %553 = vmatpush1.msra.mxu0 0.0
          %554 = vmatprep.subr.mxu0 0.0
          %555 = vmatpush1.msra.mxu0 0.0
          %556 = vmatprep.subr.mxu0 0.0
          %557 = vmatpush1.msra.mxu0 0.0
          %558 = vmatprep.subr.mxu0 0.0
          %559 = vmatpush1.msra.mxu0 0.0
          %560 = vmatprep.subr.mxu0 0.0
          %561 = vmatpush1.msra.mxu0 0.0
          %562 = vmatprep.subr.mxu0 0.0
          %563 = vmatpush1.msra.mxu0 0.0
          %564 = vmatprep.subr.mxu0 0.0
          %565 = vmatpush1.msra.mxu0 0.0
          %566 = vmatprep.subr.mxu0 0.0
          %567 = vmatpush1.msra.mxu0 0.0
          %568 = vmatprep.mubr.f32.mxu0 0.0
          %569 = vmatmul.mubr.f32.gmra.mrb[0].mxu0 %v480
          %v570 = vpop.f32.mrb[0].mxu0
          %v571 = vadd.f32 0.0, %v570
          %v572 = vpop.f32.mrb[0].mxu0
          %573 = vmatprep.mubr.f32.mxu0 0.0
          %574 = vmatmul.mubr.f32.gmra.mrb[0].mxu0 %v481
          %v575 = vpop.f32.mrb[0].mxu0
          %v576 = vadd.f32 0.0, %v575
          %v577 = vpop.f32.mrb[0].mxu0
          %578 = vmatprep.mubr.f32.mxu0 0.0
          %579 = vmatmul.mubr.f32.gmra.mrb[0].mxu0 %v482
          %v580 = vpop.f32.mrb[0].mxu0
          %v581 = vadd.f32 0.0, %v580
          %v582 = vpop.f32.mrb[0].mxu0
          %583 = vmatprep.mubr.f32.mxu0 0.0
          %584 = vmatmul.mubr.f32.gmra.mrb[0].mxu0 %v483
          %v585 = vpop.f32.mrb[0].mxu0
          %v586 = vadd.f32 0.0, %v585
          %v587 = vpop.f32.mrb[0].mxu0
          %588 = vmatprep.mubr.f32.mxu0 0.0
          %589 = vmatmul.mubr.f32.gmra.mrb[0].mxu0 %v484
          %v590 = vpop.f32.mrb[0].mxu0
          %v591 = vadd.f32 0.0, %v590
          %v592 = vpop.f32.mrb[0].mxu0
          %593 = vmatprep.mubr.f32.mxu0 0.0
          %594 = vmatmul.mubr.f32.gmra.mrb[0].mxu0 %v485
          %v595 = vpop.f32.mrb[0].mxu0
          %v596 = vadd.f32 0.0, %v595
          %v597 = vpop.f32.mrb[0].mxu0
          %598 = vmatprep.mubr.f32.mxu0 0.0
          %599 = vmatmul.mubr.f32.gmra.mrb[0].mxu0 %v486
          %v600 = vpop.f32.mrb[0].mxu0
          %v601 = vadd.f32 0.0, %v600
          %v602 = vpop.f32.mrb[0].mxu0
          %603 = vmatprep.mubr.f32.mxu0 0.0
          %604 = vmatmul.mubr.f32.gmra.mrb[0].mxu0 %v487
          %v605 = vpop.f32.mrb[0].mxu0
          %v606 = vadd.f32 0.0, %v605
          %v607 = vpop.f32.mrb[0].mxu0
          %608 = vdwg.mxu0
          %609 = vst [vmem:[%s230] sm:$0xff] %v571
          %610 = vst [vmem:[%s230 + $0x8] sm:$0xff] %v576
          %611 = vst [vmem:[%s230 + $0x10] sm:$0xff] %v581
          %612 = vst [vmem:[%s230 + $0x18] sm:$0xff] %v586
          %613 = vst [vmem:[%s230 + $0x20] sm:$0xff] %v591
          %614 = vst [vmem:[%s230 + $0x28] sm:$0xff] %v596
          %615 = vst [vmem:[%s230 + $0x30] sm:$0xff] %v601
          %616 = vst [vmem:[%s230 + $0x38] sm:$0xff] %v606
        $region52: #{tpu_custom_call.1} parent=39 // pred_fallthru
          _
        %s617 = sand.u32 %s149, 1
        %s618 = scalar_lea.sflag [#allocation5], %s617
        %s619 = sand.u32 %s149, 1
        %s620 = smul.addr %s619, 64
        %s621 = scalar_lea.vmem [#allocation4], %s620
        // Predicated region
        $region53: #{tpu_custom_call.1} parent=39 // pred_check
          %p622 = pneg %p159
        $region54: #{tpu_custom_call.1} parent=39 // pred_check_branch
          %624 = sbr.rel (%p622) target = $region56
        $region55: #{tpu_custom_call.1} parent=39 // pred_region
          %s625 = smul.u32 8, %s24
          %s627 = ssub.s32 1024, 1024
          %628 = vsyncadd %s618, %s627
          %s629 = smul.addr %s625, 128
          %s630 = scalar_lea.hbm %s5, %s629
          %s631 = sshll.u32 %s621, 4
          %s632 = int_to_ptr.vmem [resolvable:$true] %s631
          %637 = dma.vmem_to_hbm [thread:$0]  %s632, 1024, %s630, %s618, 128, 128, 8
        $region56: #{tpu_custom_call.1} parent=39 // pred_fallthru
          _
      $region40: #{tpu_custom_call.1} parent=5 // pred_fallthru
        _
      %p638 = scmp.le.s32.totalorder 2, %s14
      // Predicated region
      $region57: #{tpu_custom_call.1} parent=5 // pred_check
        %p639 = pneg %p638
      $region58: #{tpu_custom_call.1} parent=5 // pred_check_branch
        %641 = sbr.rel (%p639) target = $region60
      $region59: #{tpu_custom_call.1} parent=5 // pred_region
        %s642 = ssub.s32 %s14, 2
        // Predicated region
        $region61: #{tpu_custom_call.1} parent=59 // pred_check
          %p643 = pneg %p165
        $region62: #{tpu_custom_call.1} parent=59 // pred_check_branch
          %645 = sbr.rel (%p643) target = $region64
        $region63: #{tpu_custom_call.1} parent=59 // pred_region
          %s646 = sand.u32 %s150, 1
          %s647 = scalar_lea.sflag [#allocation5], %s646
          %s648 = sand.u32 %s150, 1
          %s649 = smul.addr %s648, 64
          %s650 = scalar_lea.vmem [#allocation4], %s649
          %651 = dma.done %s647, 1024
        $region64: #{tpu_custom_call.1} parent=59 // pred_fallthru
          _
      $region60: #{tpu_custom_call.1} parent=5 // pred_fallthru
        _
    $region6: #{tpu_custom_call.1} parent=1 // loop_footer
      %s18 = sadd.s32 1, %s14
    $region7: #{tpu_custom_call.1} parent=1 // loop_footer_branch
      %13 = sbr.rel target = $region3
    $region8: #{tpu_custom_call.1} parent=1 // loop_exit
      _
    %652 = vsyncpa [#allocation5], 1
    %s653 = scalar_lea.sflag [#allocation5], 1
    %654 = vsyncpa %s653, 1

</llo_original>
